<compile_context>
chip_gen: v5e
topology: v5e:2x2
jax: 0.10.0
libtpu: 0.0.40
codegen_flags: <defaults>
</compile_context>

<pallas_src>
import jax
import jax.numpy as jnp
from jax.experimental import pallas as pl
from jax.experimental.pallas import tpu as pltpu

HIDDEN = 32            # hidden_size
BATCH = 8              # demo batch of (user, item) pairs
EPS = 1e-5             # nn.LayerNorm default eps
MATMUL_DTYPE = jnp.bfloat16   # MXU operand dtype; accumulation stays f32


def _layernorm(x, gamma, beta):
    # LayerNorm over last dim, biased variance (PyTorch semantics), f32 math.
    inv_h = 1.0 / x.shape[-1]          # derived from runtime shape (not a global const)
    mu = jnp.sum(x, axis=-1, keepdims=True) * inv_h
    xc = x - mu
    var = jnp.sum(xc * xc, axis=-1, keepdims=True) * inv_h
    return xc * jax.lax.rsqrt(var + EPS) * gamma + beta


def _transform(x_f32, w1, b1, g1, be1, w2, b2, g2, be2):
    # relu(linear1) -> dropout(identity, eval) -> norm1 -> relu(linear2) -> norm2
    # bf16 cast happens here (in-kernel), matmul accumulates in f32; bias/ReLU/LN stay f32.
    h = jnp.dot(x_f32.astype(w1.dtype), w1, preferred_element_type=jnp.float32) + b1
    h = jnp.maximum(h, 0.0)
    h = _layernorm(h, g1, be1)
    h2 = jnp.dot(h.astype(w2.dtype), w2, preferred_element_type=jnp.float32) + b2
    h2 = jnp.maximum(h2, 0.0)
    return _layernorm(h2, g2, be2)


def gat_kernel(u_ref, i_ref, w1_ref, w2_ref, p_ref, u_out, i_out, r_out):
    # p_ref packs the six tiny (1, H) parameters: [b1, g1, be1, b2, g2, be2].
    p = p_ref[...]
    b1, g1, be1 = p[0:1], p[1:2], p[2:3]
    b2, g2, be2 = p[3:4], p[4:5], p[5:6]
    w1 = w1_ref[...]
    w2 = w2_ref[...]

    u = _transform(u_ref[...], w1, b1, g1, be1, w2, b2, g2, be2)   # (bb, H) f32
    i = _transform(i_ref[...], w1, b1, g1, be1, w2, b2, g2, be2)   # (bb, H) f32

    u_out[...] = u
    i_out[...] = i
    r_out[...] = u * i


def _pick_block_b(batch):
    # Cap at 1024 rows (~1.2 MiB of activations double-buffered -> far below the
    # scoped VMEM limit on v5e/v6e/v7x). Aim for >= 2 grid steps when the batch is
    # big enough so dimension_semantics=("parallel",) can shard across v7x's two
    # TensorCores. Always a multiple of 8 (sublane rule); awkward batch sizes get
    # padded in the wrapper instead of degrading to tiny blocks.
    cap = 1024
    if batch <= 16:
        return max(8, ((batch + 7) // 8) * 8)
    half = (batch + 1) // 2
    block = min(cap, half)
    return ((block + 7) // 8) * 8


def gat_forward(users_pref_raw, items_pref_raw, params, *, block_b=None):
    """users/items_pref_raw: (B, 2H) float32. Returns (users_pref, items_pref, relations_pref)."""
    B, twoH = users_pref_raw.shape
    H = twoH // 2
    if block_b is None:
        block_b = _pick_block_b(B)
    grid_steps = pl.cdiv(B, block_b)
    B_pad = grid_steps * block_b

    u_in, i_in = users_pref_raw, items_pref_raw
    if B_pad != B:
        pad = ((0, B_pad - B), (0, 0))
        u_in = jnp.pad(u_in, pad)
        i_in = jnp.pad(i_in, pad)

    # Tiny weights: one-time bf16 cast in the wrapper (negligible), halves their VMEM.
    w1 = params["w1"].astype(MATMUL_DTYPE)
    w2 = params["w2"].astype(MATMUL_DTYPE)
    # Pack the six (1, H) bias/LayerNorm params into one (6, H) f32 input.
    p_pack = jnp.concatenate([params["b1"], params["g1"], params["be1"],
                              params["b2"], params["g2"], params["be2"]], axis=0)

    def full_spec(shape):
        # Tiny parameters: full-shape block, constant index -> resident in VMEM.
        return pl.BlockSpec(shape, lambda b: (0, 0))

    in_specs = [
        pl.BlockSpec((block_b, twoH), lambda b: (b, 0)),   # users block (f32)
        pl.BlockSpec((block_b, twoH), lambda b: (b, 0)),   # items block (f32)
        full_spec((twoH, H)),                              # w1 (bf16)
        full_spec((H, H)),                                 # w2 (bf16)
        full_spec((6, H)),                                 # packed b1,g1,be1,b2,g2,be2
    ]
    out_spec = pl.BlockSpec((block_b, H), lambda b: (b, 0))
    out_shape = tuple(jax.ShapeDtypeStruct((B_pad, H), jnp.float32) for _ in range(3))

    u_p, i_p, r_p = pl.pallas_call(
        gat_kernel,
        out_shape=out_shape,
        grid_spec=pltpu.PrefetchScalarGridSpec(
            num_scalar_prefetch=0,
            grid=(grid_steps,),
            in_specs=in_specs,
            out_specs=(out_spec, out_spec, out_spec),
        ),
        compiler_params=pltpu.CompilerParams(
            # Batch blocks are independent -> shard across v7x's 2 TensorCores.
            dimension_semantics=("parallel",),
        ),
    )(u_in, i_in, w1, w2, p_pack)

    if B_pad != B:
        u_p, i_p, r_p = u_p[:B], i_p[:B], r_p[:B]
    return u_p, i_p, r_p


def make_params(key, hidden):
    # linear1: Linear(2H -> H), xavier_normal_ weight; linear2: Linear(H -> H).
    # Weights stored pre-transposed so the kernel does x @ W.
    k1, k2, k3, k4 = jax.random.split(key, 4)
    fan_in1, fan_out1 = 2 * hidden, hidden
    std1 = (2.0 / (fan_in1 + fan_out1)) ** 0.5
    fan_in2, fan_out2 = hidden, hidden
    std2 = (2.0 / (fan_in2 + fan_out2)) ** 0.5
    w1 = std1 * jax.random.normal(k1, (2 * hidden, hidden), jnp.float32)
    w2 = std2 * jax.random.normal(k2, (hidden, hidden), jnp.float32)
    b1 = jax.random.uniform(k3, (1, hidden), jnp.float32,
                            -1.0 / (fan_in1 ** 0.5), 1.0 / (fan_in1 ** 0.5))
    b2 = jax.random.uniform(k4, (1, hidden), jnp.float32,
                            -1.0 / (fan_in2 ** 0.5), 1.0 / (fan_in2 ** 0.5))
    ones = jnp.ones((1, hidden), jnp.float32)
    zeros = jnp.zeros((1, hidden), jnp.float32)
    return {"w1": w1, "b1": b1, "g1": ones, "be1": zeros,
            "w2": w2, "b2": b2, "g2": ones, "be2": zeros}


def reference(users_pref_raw, items_pref_raw, p, matmul_dtype=jnp.float32):
    # Pure-JAX reference; matmul_dtype lets us match the kernel's bf16 operands exactly.
    def tfm(x):
        w1 = p["w1"].astype(matmul_dtype)
        w2 = p["w2"].astype(matmul_dtype)
        h = jnp.dot(x.astype(matmul_dtype), w1,
                    preferred_element_type=jnp.float32) + p["b1"]
        h = jnp.maximum(h, 0.0)
        h = _layernorm(h, p["g1"], p["be1"])
        h2 = jnp.dot(h.astype(matmul_dtype), w2,
                     preferred_element_type=jnp.float32) + p["b2"]
        h2 = jnp.maximum(h2, 0.0)
        return _layernorm(h2, p["g2"], p["be2"])
    u = tfm(users_pref_raw)
    i = tfm(items_pref_raw)
    return u, i, u * i


if __name__ == "__main__":
    key = jax.random.PRNGKey(0)
    kp, ku, ki = jax.random.split(key, 3)
    params = make_params(kp, HIDDEN)

    # Precomputed node preference vectors: cat(this_node_tensor, node_preference)
    # -> shape (B, 2 * hidden_size).
    users_pref_raw = jax.random.normal(ku, (BATCH, 2 * HIDDEN), jnp.float32)
    items_pref_raw = jax.random.normal(ki, (BATCH, 2 * HIDDEN), jnp.float32)

    u_pref, i_pref, rel_pref = gat_forward(users_pref_raw, items_pref_raw, params)
    jax.block_until_ready((u_pref, i_pref, rel_pref))

    assert u_pref.shape == (BATCH, HIDDEN)
    assert i_pref.shape == (BATCH, HIDDEN)
    assert rel_pref.shape == (BATCH, HIDDEN)

    # Tight check vs. a JAX reference using the same bf16 matmul operands as the kernel.
    u_bf, i_bf, r_bf = reference(users_pref_raw, items_pref_raw, params, MATMUL_DTYPE)
    assert jnp.allclose(u_pref, u_bf, atol=1e-2, rtol=1e-2)
    assert jnp.allclose(i_pref, i_bf, atol=1e-2, rtol=1e-2)
    assert jnp.allclose(rel_pref, r_bf, atol=1e-2, rtol=1e-2)

    # Loose check vs. the full-f32 reference (bf16 matmul operands -> ~1e-2 rel error).
    u_f32, i_f32, r_f32 = reference(users_pref_raw, items_pref_raw, params, jnp.float32)
    assert jnp.allclose(u_pref, u_f32, atol=5e-2, rtol=5e-2)
    assert jnp.allclose(i_pref, i_f32, atol=5e-2, rtol=5e-2)
    assert jnp.allclose(rel_pref, r_f32, atol=5e-2, rtol=5e-2)

    print("KERNEL_OK")
</pallas_src>

<mosaic_0001>
module attributes {stable_mosaic.version = 11 : i64} {
  func.func @gat_kernel(%arg0: i32, %arg1: memref<8x64xf32, #tpu.memory_space<vmem>>, %arg2: memref<8x64xf32, #tpu.memory_space<vmem>>, %arg3: memref<64x32xbf16, #tpu.memory_space<vmem>>, %arg4: memref<32x32xbf16, #tpu.memory_space<vmem>>, %arg5: memref<6x32xf32, #tpu.memory_space<vmem>>, %arg6: memref<8x32xf32, #tpu.memory_space<vmem>>, %arg7: memref<8x32xf32, #tpu.memory_space<vmem>>, %arg8: memref<8x32xf32, #tpu.memory_space<vmem>>) attributes {dimension_semantics = [#tpu.dimension_semantics<parallel>], iteration_bounds = array<i64: 1>, scalar_prefetch = 0 : i64, scratch_operands = 0 : i64, tpu.core_type = #tpu.core_type<tc>, window_params = [{transform_indices = @transform_0, window_bounds = array<i64: 8, 64>}, {transform_indices = @transform_1, window_bounds = array<i64: 8, 64>}, {pipeline_mode = #tpu.pipeline_mode<synchronous>, transform_indices = @transform_2, window_bounds = array<i64: 64, 32>}, {pipeline_mode = #tpu.pipeline_mode<synchronous>, transform_indices = @transform_3, window_bounds = array<i64: 32, 32>}, {pipeline_mode = #tpu.pipeline_mode<synchronous>, transform_indices = @transform_4, window_bounds = array<i64: 6, 32>}, {transform_indices = @transform_5, window_bounds = array<i64: 8, 32>}, {transform_indices = @transform_6, window_bounds = array<i64: 8, 32>}, {transform_indices = @transform_7, window_bounds = array<i64: 8, 32>}]} {
    %c0 = arith.constant 0 : index
    %c0_0 = arith.constant 0 : index
    %0 = vector.load %arg5[%c0, %c0_0] : memref<6x32xf32, #tpu.memory_space<vmem>>, vector<6x32xf32>
    %1 = vector.extract_strided_slice %0 {offsets = [0, 0], sizes = [1, 32], strides = [1, 1]} : vector<6x32xf32> to vector<1x32xf32>
    %2 = vector.extract_strided_slice %0 {offsets = [1, 0], sizes = [1, 32], strides = [1, 1]} : vector<6x32xf32> to vector<1x32xf32>
    %3 = vector.extract_strided_slice %0 {offsets = [2, 0], sizes = [1, 32], strides = [1, 1]} : vector<6x32xf32> to vector<1x32xf32>
    %4 = vector.extract_strided_slice %0 {offsets = [3, 0], sizes = [1, 32], strides = [1, 1]} : vector<6x32xf32> to vector<1x32xf32>
    %5 = vector.extract_strided_slice %0 {offsets = [4, 0], sizes = [1, 32], strides = [1, 1]} : vector<6x32xf32> to vector<1x32xf32>
    %6 = vector.extract_strided_slice %0 {offsets = [5, 0], sizes = [1, 32], strides = [1, 1]} : vector<6x32xf32> to vector<1x32xf32>
    %c0_1 = arith.constant 0 : index
    %c0_2 = arith.constant 0 : index
    %7 = vector.load %arg3[%c0_1, %c0_2] : memref<64x32xbf16, #tpu.memory_space<vmem>>, vector<64x32xbf16>
    %c0_3 = arith.constant 0 : index
    %c0_4 = arith.constant 0 : index
    %8 = vector.load %arg4[%c0_3, %c0_4] : memref<32x32xbf16, #tpu.memory_space<vmem>>, vector<32x32xbf16>
    %c0_5 = arith.constant 0 : index
    %c0_6 = arith.constant 0 : index
    %9 = vector.load %arg1[%c0_5, %c0_6] : memref<8x64xf32, #tpu.memory_space<vmem>>, vector<8x64xf32>
    %10 = arith.truncf %9 : vector<8x64xf32> to vector<8x64xbf16>
    %cst = arith.constant dense<0.000000e+00> : vector<8x32xf32>
    %11 = tpu.matmul %10, %7, %cst {dimension_numbers = #tpu.dot_dimension_numbers<[1], [0], [0], [1], [0, 0, 1, 1], [], []>} : vector<8x64xbf16>, vector<64x32xbf16>, vector<8x32xf32> -> vector<8x32xf32>
    %12 = vector.broadcast %1 : vector<1x32xf32> to vector<8x32xf32>
    %13 = arith.addf %11, %12 : vector<8x32xf32>
    %cst_7 = arith.constant 0.000000e+00 : f32
    %14 = vector.broadcast %cst_7 : f32 to vector<8x32xf32>
    %15 = arith.maximumf %13, %14 : vector<8x32xf32>
    %cst_8 = arith.constant dense<0.000000e+00> : vector<8xf32>
    %16 = vector.multi_reduction <add>, %15, %cst_8 [1] : vector<8x32xf32> to vector<8xf32>
    %17 = vector.shape_cast %16 : vector<8xf32> to vector<8x1xf32>
    %cst_9 = arith.constant 3.125000e-02 : f32
    %18 = vector.broadcast %cst_9 : f32 to vector<8x1xf32>
    %19 = arith.mulf %17, %18 : vector<8x1xf32>
    %20 = vector.broadcast %19 : vector<8x1xf32> to vector<8x32xf32>
    %21 = arith.subf %15, %20 : vector<8x32xf32>
    %22 = arith.mulf %21, %21 : vector<8x32xf32>
    %cst_10 = arith.constant dense<0.000000e+00> : vector<8xf32>
    %23 = vector.multi_reduction <add>, %22, %cst_10 [1] : vector<8x32xf32> to vector<8xf32>
    %24 = vector.shape_cast %23 : vector<8xf32> to vector<8x1xf32>
    %cst_11 = arith.constant 3.125000e-02 : f32
    %25 = vector.broadcast %cst_11 : f32 to vector<8x1xf32>
    %26 = arith.mulf %24, %25 : vector<8x1xf32>
    %cst_12 = arith.constant 9.99999974E-6 : f32
    %27 = vector.broadcast %cst_12 : f32 to vector<8x1xf32>
    %28 = arith.addf %26, %27 : vector<8x1xf32>
    %29 = math.rsqrt %28 : vector<8x1xf32>
    %30 = vector.broadcast %29 : vector<8x1xf32> to vector<8x32xf32>
    %31 = arith.mulf %21, %30 : vector<8x32xf32>
    %32 = vector.broadcast %2 : vector<1x32xf32> to vector<8x32xf32>
    %33 = arith.mulf %31, %32 : vector<8x32xf32>
    %34 = vector.broadcast %3 : vector<1x32xf32> to vector<8x32xf32>
    %35 = arith.addf %33, %34 : vector<8x32xf32>
    %36 = arith.truncf %35 : vector<8x32xf32> to vector<8x32xbf16>
    %cst_13 = arith.constant dense<0.000000e+00> : vector<8x32xf32>
    %37 = tpu.matmul %36, %8, %cst_13 {dimension_numbers = #tpu.dot_dimension_numbers<[1], [0], [0], [1], [0, 0, 1, 1], [], []>} : vector<8x32xbf16>, vector<32x32xbf16>, vector<8x32xf32> -> vector<8x32xf32>
    %38 = vector.broadcast %4 : vector<1x32xf32> to vector<8x32xf32>
    %39 = arith.addf %37, %38 : vector<8x32xf32>
    %cst_14 = arith.constant 0.000000e+00 : f32
    %40 = vector.broadcast %cst_14 : f32 to vector<8x32xf32>
    %41 = arith.maximumf %39, %40 : vector<8x32xf32>
    %cst_15 = arith.constant dense<0.000000e+00> : vector<8xf32>
    %42 = vector.multi_reduction <add>, %41, %cst_15 [1] : vector<8x32xf32> to vector<8xf32>
    %43 = vector.shape_cast %42 : vector<8xf32> to vector<8x1xf32>
    %cst_16 = arith.constant 3.125000e-02 : f32
    %44 = vector.broadcast %cst_16 : f32 to vector<8x1xf32>
    %45 = arith.mulf %43, %44 : vector<8x1xf32>
    %46 = vector.broadcast %45 : vector<8x1xf32> to vector<8x32xf32>
    %47 = arith.subf %41, %46 : vector<8x32xf32>
    %48 = arith.mulf %47, %47 : vector<8x32xf32>
    %cst_17 = arith.constant dense<0.000000e+00> : vector<8xf32>
    %49 = vector.multi_reduction <add>, %48, %cst_17 [1] : vector<8x32xf32> to vector<8xf32>
    %50 = vector.shape_cast %49 : vector<8xf32> to vector<8x1xf32>
    %cst_18 = arith.constant 3.125000e-02 : f32
    %51 = vector.broadcast %cst_18 : f32 to vector<8x1xf32>
    %52 = arith.mulf %50, %51 : vector<8x1xf32>
    %cst_19 = arith.constant 9.99999974E-6 : f32
    %53 = vector.broadcast %cst_19 : f32 to vector<8x1xf32>
    %54 = arith.addf %52, %53 : vector<8x1xf32>
    %55 = math.rsqrt %54 : vector<8x1xf32>
    %56 = vector.broadcast %55 : vector<8x1xf32> to vector<8x32xf32>
    %57 = arith.mulf %47, %56 : vector<8x32xf32>
    %58 = vector.broadcast %5 : vector<1x32xf32> to vector<8x32xf32>
    %59 = arith.mulf %57, %58 : vector<8x32xf32>
    %60 = vector.broadcast %6 : vector<1x32xf32> to vector<8x32xf32>
    %61 = arith.addf %59, %60 : vector<8x32xf32>
    %c0_20 = arith.constant 0 : index
    %c0_21 = arith.constant 0 : index
    %62 = vector.load %arg2[%c0_20, %c0_21] : memref<8x64xf32, #tpu.memory_space<vmem>>, vector<8x64xf32>
    %63 = arith.truncf %62 : vector<8x64xf32> to vector<8x64xbf16>
    %cst_22 = arith.constant dense<0.000000e+00> : vector<8x32xf32>
    %64 = tpu.matmul %63, %7, %cst_22 {dimension_numbers = #tpu.dot_dimension_numbers<[1], [0], [0], [1], [0, 0, 1, 1], [], []>} : vector<8x64xbf16>, vector<64x32xbf16>, vector<8x32xf32> -> vector<8x32xf32>
    %65 = vector.broadcast %1 : vector<1x32xf32> to vector<8x32xf32>
    %66 = arith.addf %64, %65 : vector<8x32xf32>
    %cst_23 = arith.constant 0.000000e+00 : f32
    %67 = vector.broadcast %cst_23 : f32 to vector<8x32xf32>
    %68 = arith.maximumf %66, %67 : vector<8x32xf32>
    %cst_24 = arith.constant dense<0.000000e+00> : vector<8xf32>
    %69 = vector.multi_reduction <add>, %68, %cst_24 [1] : vector<8x32xf32> to vector<8xf32>
    %70 = vector.shape_cast %69 : vector<8xf32> to vector<8x1xf32>
    %cst_25 = arith.constant 3.125000e-02 : f32
    %71 = vector.broadcast %cst_25 : f32 to vector<8x1xf32>
    %72 = arith.mulf %70, %71 : vector<8x1xf32>
    %73 = vector.broadcast %72 : vector<8x1xf32> to vector<8x32xf32>
    %74 = arith.subf %68, %73 : vector<8x32xf32>
    %75 = arith.mulf %74, %74 : vector<8x32xf32>
    %cst_26 = arith.constant dense<0.000000e+00> : vector<8xf32>
    %76 = vector.multi_reduction <add>, %75, %cst_26 [1] : vector<8x32xf32> to vector<8xf32>
    %77 = vector.shape_cast %76 : vector<8xf32> to vector<8x1xf32>
    %cst_27 = arith.constant 3.125000e-02 : f32
    %78 = vector.broadcast %cst_27 : f32 to vector<8x1xf32>
    %79 = arith.mulf %77, %78 : vector<8x1xf32>
    %cst_28 = arith.constant 9.99999974E-6 : f32
    %80 = vector.broadcast %cst_28 : f32 to vector<8x1xf32>
    %81 = arith.addf %79, %80 : vector<8x1xf32>
    %82 = math.rsqrt %81 : vector<8x1xf32>
    %83 = vector.broadcast %82 : vector<8x1xf32> to vector<8x32xf32>
    %84 = arith.mulf %74, %83 : vector<8x32xf32>
    %85 = vector.broadcast %2 : vector<1x32xf32> to vector<8x32xf32>
    %86 = arith.mulf %84, %85 : vector<8x32xf32>
    %87 = vector.broadcast %3 : vector<1x32xf32> to vector<8x32xf32>
    %88 = arith.addf %86, %87 : vector<8x32xf32>
    %89 = arith.truncf %88 : vector<8x32xf32> to vector<8x32xbf16>
    %cst_29 = arith.constant dense<0.000000e+00> : vector<8x32xf32>
    %90 = tpu.matmul %89, %8, %cst_29 {dimension_numbers = #tpu.dot_dimension_numbers<[1], [0], [0], [1], [0, 0, 1, 1], [], []>} : vector<8x32xbf16>, vector<32x32xbf16>, vector<8x32xf32> -> vector<8x32xf32>
    %91 = vector.broadcast %4 : vector<1x32xf32> to vector<8x32xf32>
    %92 = arith.addf %90, %91 : vector<8x32xf32>
    %cst_30 = arith.constant 0.000000e+00 : f32
    %93 = vector.broadcast %cst_30 : f32 to vector<8x32xf32>
    %94 = arith.maximumf %92, %93 : vector<8x32xf32>
    %cst_31 = arith.constant dense<0.000000e+00> : vector<8xf32>
    %95 = vector.multi_reduction <add>, %94, %cst_31 [1] : vector<8x32xf32> to vector<8xf32>
    %96 = vector.shape_cast %95 : vector<8xf32> to vector<8x1xf32>
    %cst_32 = arith.constant 3.125000e-02 : f32
    %97 = vector.broadcast %cst_32 : f32 to vector<8x1xf32>
    %98 = arith.mulf %96, %97 : vector<8x1xf32>
    %99 = vector.broadcast %98 : vector<8x1xf32> to vector<8x32xf32>
    %100 = arith.subf %94, %99 : vector<8x32xf32>
    %101 = arith.mulf %100, %100 : vector<8x32xf32>
    %cst_33 = arith.constant dense<0.000000e+00> : vector<8xf32>
    %102 = vector.multi_reduction <add>, %101, %cst_33 [1] : vector<8x32xf32> to vector<8xf32>
    %103 = vector.shape_cast %102 : vector<8xf32> to vector<8x1xf32>
    %cst_34 = arith.constant 3.125000e-02 : f32
    %104 = vector.broadcast %cst_34 : f32 to vector<8x1xf32>
    %105 = arith.mulf %103, %104 : vector<8x1xf32>
    %cst_35 = arith.constant 9.99999974E-6 : f32
    %106 = vector.broadcast %cst_35 : f32 to vector<8x1xf32>
    %107 = arith.addf %105, %106 : vector<8x1xf32>
    %108 = math.rsqrt %107 : vector<8x1xf32>
    %109 = vector.broadcast %108 : vector<8x1xf32> to vector<8x32xf32>
    %110 = arith.mulf %100, %109 : vector<8x32xf32>
    %111 = vector.broadcast %5 : vector<1x32xf32> to vector<8x32xf32>
    %112 = arith.mulf %110, %111 : vector<8x32xf32>
    %113 = vector.broadcast %6 : vector<1x32xf32> to vector<8x32xf32>
    %114 = arith.addf %112, %113 : vector<8x32xf32>
    %c0_36 = arith.constant 0 : index
    %c0_37 = arith.constant 0 : index
    %115 = vector.load %arg6[%c0_36, %c0_37] : memref<8x32xf32, #tpu.memory_space<vmem>>, vector<8x32xf32>
    tpu.vector_store %arg6[%c0_36, %c0_37], %61 {strides = array<i32>} : memref<8x32xf32, #tpu.memory_space<vmem>>, vector<8x32xf32>,
    %c0_38 = arith.constant 0 : index
    %c0_39 = arith.constant 0 : index
    %116 = vector.load %arg7[%c0_38, %c0_39] : memref<8x32xf32, #tpu.memory_space<vmem>>, vector<8x32xf32>
    tpu.vector_store %arg7[%c0_38, %c0_39], %114 {strides = array<i32>} : memref<8x32xf32, #tpu.memory_space<vmem>>, vector<8x32xf32>,
    %117 = arith.mulf %61, %114 : vector<8x32xf32>
    %c0_40 = arith.constant 0 : index
    %c0_41 = arith.constant 0 : index
    %118 = vector.load %arg8[%c0_40, %c0_41] : memref<8x32xf32, #tpu.memory_space<vmem>>, vector<8x32xf32>
    tpu.vector_store %arg8[%c0_40, %c0_41], %117 {strides = array<i32>} : memref<8x32xf32, #tpu.memory_space<vmem>>, vector<8x32xf32>,
    return
  }
  func.func @transform_0(%arg0: i32) -> (i32, i32) {
    %c0_i32 = arith.constant 0 : i32
    %c0_i32_0 = arith.constant 0 : i32
    return %arg0, %c0_i32 : i32, i32
  }
  func.func @transform_1(%arg0: i32) -> (i32, i32) {
    %c0_i32 = arith.constant 0 : i32
    %c0_i32_0 = arith.constant 0 : i32
    return %arg0, %c0_i32 : i32, i32
  }
  func.func @transform_2(%arg0: i32) -> (i32, i32) {
    %c0_i32 = arith.constant 0 : i32
    %c0_i32_0 = arith.constant 0 : i32
    %c0_i32_1 = arith.constant 0 : i32
    return %c0_i32, %c0_i32_0 : i32, i32
  }
  func.func @transform_3(%arg0: i32) -> (i32, i32) {
    %c0_i32 = arith.constant 0 : i32
    %c0_i32_0 = arith.constant 0 : i32
    %c0_i32_1 = arith.constant 0 : i32
    return %c0_i32, %c0_i32_0 : i32, i32
  }
  func.func @transform_4(%arg0: i32) -> (i32, i32) {
    %c0_i32 = arith.constant 0 : i32
    %c0_i32_0 = arith.constant 0 : i32
    %c0_i32_1 = arith.constant 0 : i32
    return %c0_i32, %c0_i32_0 : i32, i32
  }
  func.func @transform_5(%arg0: i32) -> (i32, i32) {
    %c0_i32 = arith.constant 0 : i32
    %c0_i32_0 = arith.constant 0 : i32
    return %arg0, %c0_i32 : i32, i32
  }
  func.func @transform_6(%arg0: i32) -> (i32, i32) {
    %c0_i32 = arith.constant 0 : i32
    %c0_i32_0 = arith.constant 0 : i32
    return %arg0, %c0_i32 : i32, i32
  }
  func.func @transform_7(%arg0: i32) -> (i32, i32) {
    %c0_i32 = arith.constant 0 : i32
    %c0_i32_0 = arith.constant 0 : i32
    return %arg0, %c0_i32 : i32, i32
  }
}

</mosaic_0001>

<llo_original>
// kernel: tpu_custom_call.1
$region0: #{tpu_custom_call.1}
  #allocation0 [shape = 'u32[]', space=smem, size = 0x4, offset = 0x4, fixed_abs, tag = 'smem constant byte address 0x4 - core index']
  #allocation1 [shape = 'u32[72,128]{1,0:T(1,128)}', space=vmem, size = 0x9000, scoped, tag = 'internal scratch']
  %s0 = inlined_call_operand.vmem [shape: f32[8,64], index: 0, kind: input, shape index: {}]
  %s1 = inlined_call_operand.vmem [shape: f32[8,64], index: 1, kind: input, shape index: {}]
  %s2 = inlined_call_operand.vmem [shape: bf16[64,32], index: 2, kind: input, shape index: {}]
  %s3 = inlined_call_operand.vmem [shape: bf16[32,32], index: 3, kind: input, shape index: {}]
  %s4 = inlined_call_operand.vmem [shape: f32[6,32], index: 4, kind: input, shape index: {}]
  %s5 = inlined_call_operand.hbm [shape: f32[8,32], index: 5, kind: output, shape index: {0}]
  %s6 = inlined_call_operand.hbm [shape: f32[8,32], index: 6, kind: output, shape index: {1}]
  %s7 = inlined_call_operand.hbm [shape: f32[8,32], index: 7, kind: output, shape index: {2}]
  %8 = xla_tuple %s5, %s6, %s7
  %s9 = sld [smem:[#allocation0]]
  $region46: #{tpu_custom_call.1} parent=0
    _
  %s11 = ssub.s32 1, %s9
  %s12 = scalar_select 0, %s11, %s9
  $region1: #{tpu_custom_call.1} parent=0
    #allocation2 [shape = 'u8[4096]{0}', space=vmem, size = 0x1000, scoped, tag = 'output window, operand 0, single buffered']
    #allocation3 [shape = 's32[1]{0}', space=sflag, size = 0x4, scoped, tag = 'scoped memory for tpu_custom_call.1']
    #allocation4 [shape = 'u8[4096]{0}', space=vmem, size = 0x1000, scoped, tag = 'output window, operand 1, single buffered']
    #allocation5 [shape = 's32[1]{0}', space=sflag, size = 0x4, scoped, tag = 'scoped memory for tpu_custom_call.1']
    #allocation6 [shape = 'u8[4096]{0}', space=vmem, size = 0x1000, scoped, tag = 'output window, operand 2, single buffered']
    %13 = vsyncpa [#allocation3], 0
    %14 = vsyncpa [#allocation5], 0
    // Predicated region
    $region2: #{tpu_custom_call.1} parent=1 // pred_check
      _
    $region3: #{tpu_custom_call.1} parent=1 // pred_check_branch
      %16 = sbr.rel (0) target = $region5
    $region4: #{tpu_custom_call.1} parent=1 // pred_region
      _
    $region5: #{tpu_custom_call.1} parent=1 // pred_fallthru
      _
    // Predicated region
    $region6: #{tpu_custom_call.1} parent=1 // pred_check
      _
    $region7: #{tpu_custom_call.1} parent=1 // pred_check_branch
      %18 = sbr.rel (0) target = $region9
    $region8: #{tpu_custom_call.1} parent=1 // pred_region
      _
    $region9: #{tpu_custom_call.1} parent=1 // pred_fallthru
      _
    // Predicated region
    $region10: #{tpu_custom_call.1} parent=1 // pred_check
      _
    $region11: #{tpu_custom_call.1} parent=1 // pred_check_branch
      %20 = sbr.rel (0) target = $region13
    $region12: #{tpu_custom_call.1} parent=1 // pred_region
      _
    $region13: #{tpu_custom_call.1} parent=1 // pred_fallthru
      _
    // Predicated region
    $region14: #{tpu_custom_call.1} parent=1 // pred_check
      _
    $region15: #{tpu_custom_call.1} parent=1 // pred_check_branch
      %22 = sbr.rel (0) target = $region17
    $region16: #{tpu_custom_call.1} parent=1 // pred_region
      _
    $region17: #{tpu_custom_call.1} parent=1 // pred_fallthru
      _
    // Predicated region
    $region18: #{tpu_custom_call.1} parent=1 // pred_check
      _
    $region19: #{tpu_custom_call.1} parent=1 // pred_check_branch
      %24 = sbr.rel (0) target = $region21
    $region20: #{tpu_custom_call.1} parent=1 // pred_region
      _
    $region21: #{tpu_custom_call.1} parent=1 // pred_fallthru
      _
    %v26 = vld [vmem:[%s4] sm:$0x3f]
    %v27 = vld [vmem:[%s2] sm:$0xf]
    %v28 = vld [vmem:[%s2 + $0x4] sm:$0xf]
    %v29 = vld [vmem:[%s2 + $0x8] sm:$0xf]
    %v30 = vld [vmem:[%s2 + $0xc] sm:$0xf]
    %v31 = vld [vmem:[%s2 + $0x10] sm:$0xf]
    %v32 = vld [vmem:[%s2 + $0x14] sm:$0xf]
    %v33 = vld [vmem:[%s2 + $0x18] sm:$0xf]
    %v34 = vld [vmem:[%s2 + $0x1c] sm:$0xf]
    %v35 = vld [vmem:[%s3] sm:$0xf]
    %v36 = vld [vmem:[%s3 + $0x4] sm:$0xf]
    %v37 = vld [vmem:[%s3 + $0x8] sm:$0xf]
    %v38 = vld [vmem:[%s3 + $0xc] sm:$0xf]
    %v39 = vld [vmem:[%s0] sm:$0xff]
    %v40 = vpack.c.bf16 %v39, %v39
    %v41 = vperm.slane %v26, 0
    %v50 = vunpack.c.l.b16 %v27
    %v51 = vunpack.c.l.b16 %v28
    %v52 = vunpack.c.l.b16 %v29
    %v53 = vunpack.c.l.b16 %v30
    %v54 = vunpack.c.l.b16 %v31
    %v55 = vunpack.c.l.b16 %v32
    %v56 = vunpack.c.l.b16 %v33
    %v57 = vunpack.c.l.b16 %v34
    %v58 = vpack.c.b16 %v51, %v50
    %v59 = vpack.c.b16 %v53, %v52
    %v60 = vpack.c.b16 %v55, %v54
    %v61 = vpack.c.b16 %v57, %v56
    %vm66 = vcmask 523264
    %v68 = vsel %vm66, %v40, 0
    %70 = vmatpush.bf16.msra.mxu0 0
    %71 = vmatpush.bf16.msra.mxu0 0
    %72 = vmatpush.bf16.msra.mxu0 0
    %73 = vmatpush.bf16.msra.mxu0 0
    %74 = vmatpush.bf16.msra.mxu0 %v61
    %75 = vmatpush.bf16.msra.mxu0 %v60
    %76 = vmatpush.bf16.msra.mxu0 %v59
    %77 = vmatpush.bf16.msra.mxu0 %v58
    %78 = vmatmul.bf16.gmra.mxu0 %v68
    %v79 = vpop.f32.mrf.mxu0
    %v80 = vadd.f32 %v41, %v79
    %v81 = vpop.f32.mrf.mxu0
    %82 = vdwg.mxu0
    %v83 = vmax.f32 %v80, 0.0
    %vm84 = vcmask 261120
    %v85 = vsel %vm84, %v83, 0.0
    %86 = vadd.xlane.f32.xlu0 %v85
    %v87 = vpop.xlane.xlu0 %86
    %v88 = vmul.f32 %v87, 0.03125
    %v89 = vsub.f32 %v83, %v88
    %v90 = vmul.f32 %v89, %v89
    %v91 = vsel %vm84, %v90, 0.0
    %92 = vadd.xlane.f32.xlu0 %v91
    %v93 = vpop.xlane.xlu0 %92
    %v94 = vmul.f32 %v93, 0.03125
    %v95 = vadd.f32 %v94, 1e-05
    %v96 = vrsqrt.pop %v95
    %v97 = vmul.f32 %v96, %v95
    %v98 = vmul.f32 %v97, %v96
    %v99 = vmul.f32 0.5, %v98
    %v100 = vsub.f32 1.5, %v99
    %v101 = vmul.f32 %v96, %v100
    %vm102 = vweird.f32 %v95
    %vm103 = vweird.f32 %v96
    %vm104 = vmor %vm102, %vm103
    %v105 = vsel %vm104, %v96, %v101
    %v106 = vmul.f32 %v89, %v105
    %v107 = vperm.slane %v26, 1
    %v108 = vmul.f32 %v106, %v107
    %v109 = vperm.slane %v26, 2
    %v110 = vadd.f32 %v108, %v109
    %v111 = vpack.c.bf16 %v110, %v110
    %v112 = vperm.slane %v26, 3
    %v117 = vunpack.c.l.b16 %v35
    %v118 = vunpack.c.l.b16 %v36
    %v119 = vunpack.c.l.b16 %v37
    %v120 = vunpack.c.l.b16 %v38
    %v121 = vpack.c.b16 %v118, %v117
    %v122 = vpack.c.b16 %v120, %v119
    %v126 = vsel %vm84, %v111, 0
    %128 = vmatpush.bf16.msra.mxu0 0
    %129 = vmatpush.bf16.msra.mxu0 0
    %130 = vmatpush.bf16.msra.mxu0 0
    %131 = vmatpush.bf16.msra.mxu0 0
    %132 = vmatpush.bf16.msra.mxu0 0
    %133 = vmatpush.bf16.msra.mxu0 0
    %134 = vmatpush.bf16.msra.mxu0 %v122
    %135 = vmatpush.bf16.msra.mxu0 %v121
    %136 = vmatmul.bf16.gmra.mxu0 %v126
    %v137 = vpop.f32.mrf.mxu0
    %v138 = vadd.f32 %v112, %v137
    %v139 = vpop.f32.mrf.mxu0
    %140 = vdwg.mxu0
    %v141 = vmax.f32 %v138, 0.0
    %v142 = vsel %vm84, %v141, 0.0
    %143 = vadd.xlane.f32.xlu0 %v142
    %v144 = vpop.xlane.xlu0 %143
    %v145 = vmul.f32 %v144, 0.03125
    %v146 = vsub.f32 %v141, %v145
    %v147 = vmul.f32 %v146, %v146
    %v148 = vsel %vm84, %v147, 0.0
    %149 = vadd.xlane.f32.xlu0 %v148
    %v150 = vpop.xlane.xlu0 %149
    %v151 = vmul.f32 %v150, 0.03125
    %v152 = vadd.f32 %v151, 1e-05
    %v153 = vrsqrt.pop %v152
    %v154 = vmul.f32 %v153, %v152
    %v155 = vmul.f32 %v154, %v153
    %v156 = vmul.f32 0.5, %v155
    %v157 = vsub.f32 1.5, %v156
    %v158 = vmul.f32 %v153, %v157
    %vm159 = vweird.f32 %v152
    %vm160 = vweird.f32 %v153
    %vm161 = vmor %vm159, %vm160
    %v162 = vsel %vm161, %v153, %v158
    %v163 = vmul.f32 %v146, %v162
    %v164 = vperm.slane %v26, 4
    %v165 = vmul.f32 %v163, %v164
    %v166 = vperm.slane %v26, 5
    %v167 = vadd.f32 %v165, %v166
    %v168 = vld [vmem:[%s1] sm:$0xff]
    %v169 = vpack.c.bf16 %v168, %v168
    %v171 = vsel %vm66, %v169, 0
    %173 = vmatpush.bf16.msra.mxu0 0
    %174 = vmatpush.bf16.msra.mxu0 0
    %175 = vmatpush.bf16.msra.mxu0 0
    %176 = vmatpush.bf16.msra.mxu0 0
    %177 = vmatpush.bf16.msra.mxu0 %v61
    %178 = vmatpush.bf16.msra.mxu0 %v60
    %179 = vmatpush.bf16.msra.mxu0 %v59
    %180 = vmatpush.bf16.msra.mxu0 %v58
    %181 = vmatmul.bf16.gmra.mxu0 %v171
    %v182 = vpop.f32.mrf.mxu0
    %v183 = vadd.f32 %v41, %v182
    %v184 = vpop.f32.mrf.mxu0
    %185 = vdwg.mxu0
    %v186 = vmax.f32 %v183, 0.0
    %v187 = vsel %vm84, %v186, 0.0
    %188 = vadd.xlane.f32.xlu0 %v187
    %v189 = vpop.xlane.xlu0 %188
    %v190 = vmul.f32 %v189, 0.03125
    %v191 = vsub.f32 %v186, %v190
    %v192 = vmul.f32 %v191, %v191
    %v193 = vsel %vm84, %v192, 0.0
    %194 = vadd.xlane.f32.xlu0 %v193
    %v195 = vpop.xlane.xlu0 %194
    %v196 = vmul.f32 %v195, 0.03125
    %v197 = vadd.f32 %v196, 1e-05
    %v198 = vrsqrt.pop %v197
    %v199 = vmul.f32 %v198, %v197
    %v200 = vmul.f32 %v199, %v198
    %v201 = vmul.f32 0.5, %v200
    %v202 = vsub.f32 1.5, %v201
    %v203 = vmul.f32 %v198, %v202
    %vm204 = vweird.f32 %v197
    %vm205 = vweird.f32 %v198
    %vm206 = vmor %vm204, %vm205
    %v207 = vsel %vm206, %v198, %v203
    %v208 = vmul.f32 %v191, %v207
    %v209 = vmul.f32 %v208, %v107
    %v210 = vadd.f32 %v209, %v109
    %v211 = vpack.c.bf16 %v210, %v210
    %v213 = vsel %vm84, %v211, 0
    %215 = vmatpush.bf16.msra.mxu0 0
    %216 = vmatpush.bf16.msra.mxu0 0
    %217 = vmatpush.bf16.msra.mxu0 0
    %218 = vmatpush.bf16.msra.mxu0 0
    %219 = vmatpush.bf16.msra.mxu0 0
    %220 = vmatpush.bf16.msra.mxu0 0
    %221 = vmatpush.bf16.msra.mxu0 %v122
    %222 = vmatpush.bf16.msra.mxu0 %v121
    %223 = vmatmul.bf16.gmra.mxu0 %v213
    %v224 = vpop.f32.mrf.mxu0
    %v225 = vadd.f32 %v112, %v224
    %v226 = vpop.f32.mrf.mxu0
    %227 = vdwg.mxu0
    %v228 = vmax.f32 %v225, 0.0
    %v229 = vsel %vm84, %v228, 0.0
    %230 = vadd.xlane.f32.xlu0 %v229
    %v231 = vpop.xlane.xlu0 %230
    %v232 = vmul.f32 %v231, 0.03125
    %v233 = vsub.f32 %v228, %v232
    %v234 = vmul.f32 %v233, %v233
    %v235 = vsel %vm84, %v234, 0.0
    %236 = vadd.xlane.f32.xlu0 %v235
    %v237 = vpop.xlane.xlu0 %236
    %v238 = vmul.f32 %v237, 0.03125
    %v239 = vadd.f32 %v238, 1e-05
    %v240 = vrsqrt.pop %v239
    %v241 = vmul.f32 %v240, %v239
    %v242 = vmul.f32 %v241, %v240
    %v243 = vmul.f32 0.5, %v242
    %v244 = vsub.f32 1.5, %v243
    %v245 = vmul.f32 %v240, %v244
    %vm246 = vweird.f32 %v239
    %vm247 = vweird.f32 %v240
    %vm248 = vmor %vm246, %vm247
    %v249 = vsel %vm248, %v240, %v245
    %v250 = vmul.f32 %v233, %v249
    %v251 = vmul.f32 %v250, %v164
    %v252 = vadd.f32 %v251, %v166
    %253 = vst.msk [vmem:[#allocation2] sm:$0xff] %vm84, %v167
    %254 = vst.msk [vmem:[#allocation4] sm:$0xff] %vm84, %v252
    %v255 = vmul.f32 %v167, %v252
    %256 = vst.msk [vmem:[#allocation6] sm:$0xff] %vm84, %v255
    // Predicated region
    $region22: #{tpu_custom_call.1} parent=1 // pred_check
      _
    $region23: #{tpu_custom_call.1} parent=1 // pred_check_branch
      %258 = sbr.rel (0) target = $region25
    $region24: #{tpu_custom_call.1} parent=1 // pred_region
      %260 = vsyncadd [#allocation3], 0
      %s262 = sshll.u32 [#allocation2], 4
      %s263 = int_to_ptr.vmem [resolvable:$true] %s262
      %s264 = sshll.u32 %s5, 4
      %s265 = int_to_ptr.hbm [resolvable:$true] %s264
      %267 = dma.vmem_to_hbm [thread:$0]  %s263, 128, %s265, [#allocation3]
    $region25: #{tpu_custom_call.1} parent=1 // pred_fallthru
      _
    // Predicated region
    $region26: #{tpu_custom_call.1} parent=1 // pred_check
      _
    $region27: #{tpu_custom_call.1} parent=1 // pred_check_branch
      %269 = sbr.rel (0) target = $region29
    $region28: #{tpu_custom_call.1} parent=1 // pred_region
      %271 = vsyncadd [#allocation5], 0
      %s273 = sshll.u32 [#allocation4], 4
      %s274 = int_to_ptr.vmem [resolvable:$true] %s273
      %s275 = sshll.u32 %s6, 4
      %s276 = int_to_ptr.hbm [resolvable:$true] %s275
      %278 = dma.vmem_to_hbm [thread:$0]  %s274, 128, %s276, [#allocation5]
    $region29: #{tpu_custom_call.1} parent=1 // pred_fallthru
      _
    // Predicated region
    $region30: #{tpu_custom_call.1} parent=1 // pred_check
      _
    $region31: #{tpu_custom_call.1} parent=1 // pred_check_branch
      %280 = sbr.rel (0) target = $region33
    $region32: #{tpu_custom_call.1} parent=1 // pred_region
      %282 = vsyncadd [#allocation5], 0
      %s284 = sshll.u32 [#allocation6], 4
      %s285 = int_to_ptr.vmem [resolvable:$true] %s284
      %s286 = sshll.u32 %s7, 4
      %s287 = int_to_ptr.hbm [resolvable:$true] %s286
      %289 = dma.vmem_to_hbm [thread:$0]  %s285, 128, %s287, [#allocation5]
    $region33: #{tpu_custom_call.1} parent=1 // pred_fallthru
      _
    // Predicated region
    $region34: #{tpu_custom_call.1} parent=1 // pred_check
      _
    $region35: #{tpu_custom_call.1} parent=1 // pred_check_branch
      %291 = sbr.rel (0) target = $region37
    $region36: #{tpu_custom_call.1} parent=1 // pred_region
      %293 = dma.done [#allocation3], 128
    $region37: #{tpu_custom_call.1} parent=1 // pred_fallthru
      _
    // Predicated region
    $region38: #{tpu_custom_call.1} parent=1 // pred_check
      _
    $region39: #{tpu_custom_call.1} parent=1 // pred_check_branch
      %295 = sbr.rel (0) target = $region41
    $region40: #{tpu_custom_call.1} parent=1 // pred_region
      %297 = dma.done [#allocation5], 128
    $region41: #{tpu_custom_call.1} parent=1 // pred_fallthru
      _
    // Predicated region
    $region42: #{tpu_custom_call.1} parent=1 // pred_check
      _
    $region43: #{tpu_custom_call.1} parent=1 // pred_check_branch
      %299 = sbr.rel (0) target = $region45
    $region44: #{tpu_custom_call.1} parent=1 // pred_region
      %301 = dma.done [#allocation5], 128
    $region45: #{tpu_custom_call.1} parent=1 // pred_fallthru
      _
    %302 = vsyncpa [#allocation3], 1
    %303 = vsyncpa [#allocation5], 1

</llo_original>
